<compile_context>
chip_gen: v6e
topology: v6e:2x2x1
jax: 0.10.0
libtpu: 0.0.40
codegen_flags: <defaults>
</compile_context>

<pallas_src>
import functools

import jax
import jax.numpy as jnp
from jax.experimental import pallas as pl
from jax.experimental.pallas import tpu as pltpu


# ----------------------------------------------------------------------------
# Fused kernel: BN0 -> (Linear -> Mish -> BN) * num_blocks -> Linear(., 1)
# ----------------------------------------------------------------------------
def regressor_kernel(*refs, num_blocks):
    # refs = (x,
    #         bn0_scale, bn0_shift,
    #         [w_j (in,out), b_j (1,out), bn_scale_j (1,out), bn_shift_j (1,out)] * num_blocks,
    #         w_reg (in,1), b_reg (1,1),
    #         out_ref)
    x_ref = refs[0]
    out_ref = refs[-1]

    idx = 1
    bn0_s = refs[idx][...]
    bn0_t = refs[idx + 1][...]
    idx += 2

    h = x_ref[...].astype(jnp.float32)
    h = h * bn0_s + bn0_t                                   # BatchNorm1d(inputSize), folded

    for _ in range(num_blocks):
        w = refs[idx][...]                                  # (d_in, d_out) pre-transposed
        b = refs[idx + 1][...]                              # (1, d_out)
        s = refs[idx + 2][...]                              # (1, d_out) folded BN scale
        t = refs[idx + 3][...]                              # (1, d_out) folded BN shift
        idx += 4
        z = jnp.dot(h, w, preferred_element_type=jnp.float32) + b   # Linear
        z = z * jnp.tanh(jnp.logaddexp(z, 0.0))                     # Mish
        h = z * s + t                                                # BatchNorm1d (eval)

    w_reg = refs[idx][...]                                  # (inputSize, 1)
    b_reg = refs[idx + 1][...]                              # (1, 1)
    out = jnp.dot(h, w_reg, preferred_element_type=jnp.float32) + b_reg
    out_ref[...] = out.astype(out_ref.dtype)


def regressor_forward(x, flat_params, num_blocks):
    """x: (B, inputSize) f32.  flat_params: pre-folded / pre-transposed weights."""
    B = x.shape[0]
    kernel = functools.partial(regressor_kernel, num_blocks=num_blocks)
    args = [x] + list(flat_params)
    return pl.pallas_call(
        kernel,
        out_shape=jax.ShapeDtypeStruct((B, 1), jnp.float32),
        in_specs=[pl.BlockSpec(memory_space=pltpu.MemorySpace.VMEM)] * len(args),
        out_specs=pl.BlockSpec(memory_space=pltpu.MemorySpace.VMEM),
    )(*args)


# ----------------------------------------------------------------------------
# Host-side parameter handling
# ----------------------------------------------------------------------------
def _feature_dims(input_size, layers):
    dims = [input_size]
    if layers > 1:
        dims.append(input_size * 2 ** (layers - 2))
        for i in range(layers - 2, 0, -1):
            dims.append(input_size * 2 ** (i - 1))
    return dims


def init_raw_params(key, input_size, layers):
    """PyTorch-shaped parameters (Linear weight is (out, in); BN has w/b/mean/var)."""
    dims = _feature_dims(input_size, layers)

    def u(k, shape, lo=-0.1, hi=0.1):
        return jax.random.uniform(k, shape, jnp.float32, lo, hi)

    k_bn, k_rest = jax.random.split(key)
    kb = jax.random.split(k_bn, 4)
    raw = {
        'bn0': (u(kb[0], (input_size,), 0.5, 1.5),   # weight
                u(kb[1], (input_size,)),             # bias
                u(kb[2], (input_size,)),             # running_mean
                u(kb[3], (input_size,), 0.5, 1.5)),  # running_var (>0)
        'blocks': [],
    }
    for j in range(len(dims) - 1):
        d_in, d_out = dims[j], dims[j + 1]
        ks = jax.random.split(jax.random.fold_in(k_rest, j), 6)
        raw['blocks'].append(dict(
            lin_w=u(ks[0], (d_out, d_in)),
            lin_b=u(ks[1], (d_out,)),
            bn_w=u(ks[2], (d_out,), 0.5, 1.5),
            bn_b=u(ks[3], (d_out,)),
            bn_m=u(ks[4], (d_out,)),
            bn_v=u(ks[5], (d_out,), 0.5, 1.5),
        ))
    kr = jax.random.split(jax.random.fold_in(k_rest, 999), 2)
    raw['reg_w'] = u(kr[0], (1, input_size))
    raw['reg_b'] = u(kr[1], (1,))
    return raw


def _fold_bn(weight, bias, mean, var, eps=1e-5):
    scale = weight / jnp.sqrt(var + eps)
    shift = bias - mean * scale
    return scale.reshape(1, -1), shift.reshape(1, -1)


def prep_params(raw):
    """Fold BatchNorms into scale/shift and transpose Linear weights to (in, out)."""
    flat = []
    s, t = _fold_bn(*raw['bn0'])
    flat += [s, t]
    for blk in raw['blocks']:
        flat += [jnp.asarray(blk['lin_w']).T, blk['lin_b'].reshape(1, -1)]
        s, t = _fold_bn(blk['bn_w'], blk['bn_b'], blk['bn_m'], blk['bn_v'])
        flat += [s, t]
    flat += [jnp.asarray(raw['reg_w']).T, raw['reg_b'].reshape(1, -1)]
    return flat


# ----------------------------------------------------------------------------
# Pure-JAX reference (PyTorch-style math, un-folded params) for correctness
# ----------------------------------------------------------------------------
def _ref_forward(x, raw, eps=1e-5):
    def bn(z, w, b, m, v):
        return (z - m) / jnp.sqrt(v + eps) * w + b

    h = bn(x, *raw['bn0'])
    for blk in raw['blocks']:
        z = h @ blk['lin_w'].T + blk['lin_b']
        z = z * jnp.tanh(jnp.logaddexp(z, 0.0))            # Mish
        h = bn(z, blk['bn_w'], blk['bn_b'], blk['bn_m'], blk['bn_v'])
    return h @ raw['reg_w'].T + raw['reg_b']


# ----------------------------------------------------------------------------
if __name__ == "__main__":
    # Regressor(inputSize=32, layers=3):
    #   BN(32) -> [Linear(32,64), Mish, BN(64)] -> [Linear(64,32), Mish, BN(32)]
    #   -> Linear(32, 1)
    B, INPUT_SIZE, LAYERS = 8, 32, 3
    NUM_BLOCKS = LAYERS - 1

    key = jax.random.PRNGKey(0)
    kx, kp = jax.random.split(key)
    x = jax.random.normal(kx, (B, INPUT_SIZE), jnp.float32)

    raw = init_raw_params(kp, INPUT_SIZE, LAYERS)
    flat = prep_params(raw)

    out = regressor_forward(x, flat, NUM_BLOCKS)
    out = jax.block_until_ready(out)
    assert out.shape == (B, 1), out.shape

    ref = jax.block_until_ready(_ref_forward(x, raw))
    assert jnp.allclose(out, ref, rtol=1e-3, atol=1e-3), \
        f"max abs err {jnp.max(jnp.abs(out - ref))}"

    print("KERNEL_OK")
</pallas_src>

<mosaic_0001>
module attributes {stable_mosaic.version = 11 : i64} {
  func.func @regressor_kernel(%arg0: memref<8x32xf32, #tpu.memory_space<vmem>>, %arg1: memref<1x32xf32, #tpu.memory_space<vmem>>, %arg2: memref<1x32xf32, #tpu.memory_space<vmem>>, %arg3: memref<32x64xf32, #tpu.memory_space<vmem>>, %arg4: memref<1x64xf32, #tpu.memory_space<vmem>>, %arg5: memref<1x64xf32, #tpu.memory_space<vmem>>, %arg6: memref<1x64xf32, #tpu.memory_space<vmem>>, %arg7: memref<64x32xf32, #tpu.memory_space<vmem>>, %arg8: memref<1x32xf32, #tpu.memory_space<vmem>>, %arg9: memref<1x32xf32, #tpu.memory_space<vmem>>, %arg10: memref<1x32xf32, #tpu.memory_space<vmem>>, %arg11: memref<32x1xf32, #tpu.memory_space<vmem>>, %arg12: memref<1x1xf32, #tpu.memory_space<vmem>>, %arg13: memref<8x1xf32, #tpu.memory_space<vmem>>) attributes {dimension_semantics = [], scalar_prefetch = 0 : i64, scratch_operands = 0 : i64, tpu.core_type = #tpu.core_type<tc>} {
    %c0 = arith.constant 0 : index
    %c0_0 = arith.constant 0 : index
    %0 = vector.load %arg1[%c0, %c0_0] : memref<1x32xf32, #tpu.memory_space<vmem>>, vector<1x32xf32>
    %c0_1 = arith.constant 0 : index
    %c0_2 = arith.constant 0 : index
    %1 = vector.load %arg2[%c0_1, %c0_2] : memref<1x32xf32, #tpu.memory_space<vmem>>, vector<1x32xf32>
    %c0_3 = arith.constant 0 : index
    %c0_4 = arith.constant 0 : index
    %2 = vector.load %arg0[%c0_3, %c0_4] : memref<8x32xf32, #tpu.memory_space<vmem>>, vector<8x32xf32>
    %3 = vector.broadcast %0 : vector<1x32xf32> to vector<8x32xf32>
    %4 = arith.mulf %2, %3 : vector<8x32xf32>
    %5 = vector.broadcast %1 : vector<1x32xf32> to vector<8x32xf32>
    %6 = arith.addf %4, %5 : vector<8x32xf32>
    %c0_5 = arith.constant 0 : index
    %c0_6 = arith.constant 0 : index
    %7 = vector.load %arg3[%c0_5, %c0_6] : memref<32x64xf32, #tpu.memory_space<vmem>>, vector<32x64xf32>
    %c0_7 = arith.constant 0 : index
    %c0_8 = arith.constant 0 : index
    %8 = vector.load %arg4[%c0_7, %c0_8] : memref<1x64xf32, #tpu.memory_space<vmem>>, vector<1x64xf32>
    %c0_9 = arith.constant 0 : index
    %c0_10 = arith.constant 0 : index
    %9 = vector.load %arg5[%c0_9, %c0_10] : memref<1x64xf32, #tpu.memory_space<vmem>>, vector<1x64xf32>
    %c0_11 = arith.constant 0 : index
    %c0_12 = arith.constant 0 : index
    %10 = vector.load %arg6[%c0_11, %c0_12] : memref<1x64xf32, #tpu.memory_space<vmem>>, vector<1x64xf32>
    %cst = arith.constant dense<0.000000e+00> : vector<8x64xf32>
    %11 = tpu.matmul %6, %7, %cst {dimension_numbers = #tpu.dot_dimension_numbers<[1], [0], [0], [1], [0, 0, 1, 1], [], []>} : vector<8x32xf32>, vector<32x64xf32>, vector<8x64xf32> -> vector<8x64xf32>
    %12 = vector.broadcast %8 : vector<1x64xf32> to vector<8x64xf32>
    %13 = arith.addf %11, %12 : vector<8x64xf32>
    %cst_13 = arith.constant 0.000000e+00 : f32
    %14 = vector.broadcast %cst_13 : f32 to vector<8x64xf32>
    %15 = arith.maximumf %13, %14 : vector<8x64xf32>
    %16 = vector.broadcast %cst_13 : f32 to vector<8x64xf32>
    %17 = arith.subf %13, %16 : vector<8x64xf32>
    %18 = arith.cmpf one, %17, %17 : vector<8x64xf32>
    %19 = vector.broadcast %cst_13 : f32 to vector<8x64xf32>
    %20 = arith.addf %13, %19 : vector<8x64xf32>
    %21 = math.absf %17 : vector<8x64xf32>
    %cst_14 = arith.constant 0.000000e+00 : f32
    %22 = vector.broadcast %cst_14 : f32 to vector<8x64xf32>
    %23 = arith.subf %22, %21 : vector<8x64xf32>
    %24 = math.exp %23 : vector<8x64xf32>
    %25 = math.log1p %24 : vector<8x64xf32>
    %26 = arith.addf %15, %25 : vector<8x64xf32>
    %27 = arith.select %18, %20, %26 : vector<8x64xi1>, vector<8x64xf32>
    %28 = math.tanh %27 : vector<8x64xf32>
    %29 = arith.mulf %13, %28 : vector<8x64xf32>
    %30 = vector.broadcast %9 : vector<1x64xf32> to vector<8x64xf32>
    %31 = arith.mulf %29, %30 : vector<8x64xf32>
    %32 = vector.broadcast %10 : vector<1x64xf32> to vector<8x64xf32>
    %33 = arith.addf %31, %32 : vector<8x64xf32>
    %c0_15 = arith.constant 0 : index
    %c0_16 = arith.constant 0 : index
    %34 = vector.load %arg7[%c0_15, %c0_16] : memref<64x32xf32, #tpu.memory_space<vmem>>, vector<64x32xf32>
    %c0_17 = arith.constant 0 : index
    %c0_18 = arith.constant 0 : index
    %35 = vector.load %arg8[%c0_17, %c0_18] : memref<1x32xf32, #tpu.memory_space<vmem>>, vector<1x32xf32>
    %c0_19 = arith.constant 0 : index
    %c0_20 = arith.constant 0 : index
    %36 = vector.load %arg9[%c0_19, %c0_20] : memref<1x32xf32, #tpu.memory_space<vmem>>, vector<1x32xf32>
    %c0_21 = arith.constant 0 : index
    %c0_22 = arith.constant 0 : index
    %37 = vector.load %arg10[%c0_21, %c0_22] : memref<1x32xf32, #tpu.memory_space<vmem>>, vector<1x32xf32>
    %cst_23 = arith.constant dense<0.000000e+00> : vector<8x32xf32>
    %38 = tpu.matmul %33, %34, %cst_23 {dimension_numbers = #tpu.dot_dimension_numbers<[1], [0], [0], [1], [0, 0, 1, 1], [], []>} : vector<8x64xf32>, vector<64x32xf32>, vector<8x32xf32> -> vector<8x32xf32>
    %39 = vector.broadcast %35 : vector<1x32xf32> to vector<8x32xf32>
    %40 = arith.addf %38, %39 : vector<8x32xf32>
    %cst_24 = arith.constant 0.000000e+00 : f32
    %41 = vector.broadcast %cst_24 : f32 to vector<8x32xf32>
    %42 = arith.maximumf %40, %41 : vector<8x32xf32>
    %43 = vector.broadcast %cst_24 : f32 to vector<8x32xf32>
    %44 = arith.subf %40, %43 : vector<8x32xf32>
    %45 = arith.cmpf one, %44, %44 : vector<8x32xf32>
    %46 = vector.broadcast %cst_24 : f32 to vector<8x32xf32>
    %47 = arith.addf %40, %46 : vector<8x32xf32>
    %48 = math.absf %44 : vector<8x32xf32>
    %cst_25 = arith.constant 0.000000e+00 : f32
    %49 = vector.broadcast %cst_25 : f32 to vector<8x32xf32>
    %50 = arith.subf %49, %48 : vector<8x32xf32>
    %51 = math.exp %50 : vector<8x32xf32>
    %52 = math.log1p %51 : vector<8x32xf32>
    %53 = arith.addf %42, %52 : vector<8x32xf32>
    %54 = arith.select %45, %47, %53 : vector<8x32xi1>, vector<8x32xf32>
    %55 = math.tanh %54 : vector<8x32xf32>
    %56 = arith.mulf %40, %55 : vector<8x32xf32>
    %57 = vector.broadcast %36 : vector<1x32xf32> to vector<8x32xf32>
    %58 = arith.mulf %56, %57 : vector<8x32xf32>
    %59 = vector.broadcast %37 : vector<1x32xf32> to vector<8x32xf32>
    %60 = arith.addf %58, %59 : vector<8x32xf32>
    %c0_26 = arith.constant 0 : index
    %c0_27 = arith.constant 0 : index
    %61 = vector.load %arg11[%c0_26, %c0_27] : memref<32x1xf32, #tpu.memory_space<vmem>>, vector<32x1xf32>
    %c0_28 = arith.constant 0 : index
    %c0_29 = arith.constant 0 : index
    %62 = vector.load %arg12[%c0_28, %c0_29] : memref<1x1xf32, #tpu.memory_space<vmem>>, vector<1x1xf32>
    %cst_30 = arith.constant dense<0.000000e+00> : vector<8x1xf32>
    %63 = tpu.matmul %60, %61, %cst_30 {dimension_numbers = #tpu.dot_dimension_numbers<[1], [0], [0], [1], [0, 0, 1, 1], [], []>} : vector<8x32xf32>, vector<32x1xf32>, vector<8x1xf32> -> vector<8x1xf32>
    %64 = vector.broadcast %62 : vector<1x1xf32> to vector<8x1xf32>
    %65 = arith.addf %63, %64 : vector<8x1xf32>
    %c0_31 = arith.constant 0 : index
    %c0_32 = arith.constant 0 : index
    %66 = vector.load %arg13[%c0_31, %c0_32] : memref<8x1xf32, #tpu.memory_space<vmem>>, vector<8x1xf32>
    tpu.vector_store %arg13[%c0_31, %c0_32], %65 {strides = array<i32>} : memref<8x1xf32, #tpu.memory_space<vmem>>, vector<8x1xf32>,
    return
  }
}

</mosaic_0001>

<llo_original>
// kernel: tpu_custom_call.1
$region0: #{tpu_custom_call.1}
  #allocation0 [shape = 'u32[]', space=smem, size = 0x4, offset = 0x4, fixed_abs, tag = 'smem constant byte address 0x4 - core index']
  #allocation1 [shape = 'u32[144,128]{1,0:T(1,128)}', space=vmem, size = 0x12000, scoped, tag = 'internal scratch']
  #allocation2 [shape = 'f32[1,1]{1,0:T(1,128)S(1)}', space=vmem, size = 0x200, scoped, tag = 'scoped memory for tpu_custom_call.1']
  %s0 = inlined_call_operand.vmem [shape: f32[8,32], index: 0, kind: input, shape index: {}]
  %s1 = inlined_call_operand.vmem [shape: f32[1,32], index: 1, kind: input, shape index: {}]
  %s2 = inlined_call_operand.vmem [shape: f32[1,32], index: 2, kind: input, shape index: {}]
  %s3 = inlined_call_operand.vmem [shape: f32[32,64], index: 3, kind: input, shape index: {}]
  %s4 = inlined_call_operand.vmem [shape: f32[1,64], index: 4, kind: input, shape index: {}]
  %s5 = inlined_call_operand.vmem [shape: f32[1,64], index: 5, kind: input, shape index: {}]
  %s6 = inlined_call_operand.vmem [shape: f32[1,64], index: 6, kind: input, shape index: {}]
  %s7 = inlined_call_operand.vmem [shape: f32[64,32], index: 7, kind: input, shape index: {}]
  %s8 = inlined_call_operand.vmem [shape: f32[1,32], index: 8, kind: input, shape index: {}]
  %s9 = inlined_call_operand.vmem [shape: f32[1,32], index: 9, kind: input, shape index: {}]
  %s10 = inlined_call_operand.vmem [shape: f32[1,32], index: 10, kind: input, shape index: {}]
  %s11 = inlined_call_operand.vmem [shape: f32[32,1], index: 11, kind: input, shape index: {}]
  %s12 = inlined_call_operand.<no memory space> [shape: f32[1,1], index: 12, kind: input, shape index: {}]
  %s13 = inlined_call_operand.vmem [shape: f32[8,1], index: 13, kind: output, shape index: {}]
  %s14 = sld [smem:[#allocation0]]
  $region62: #{tpu_custom_call.1} parent=0
    _
  %s16 = ssub.s32 1, %s14
  %s17 = scalar_select 0, %s16, %s14
  %v18 = vstv %s12
  %19 = vst [vmem:[#allocation2] sm:$0x1] %v18
  // Predicated region
  $region2: #{tpu_custom_call.1} parent=0 // pred_check
    _
  $region3: #{tpu_custom_call.1} parent=0 // pred_check_branch
    %21 = sbr.rel (0) target = $region5
  $region4: #{tpu_custom_call.1} parent=0 // pred_region
    _
  $region5: #{tpu_custom_call.1} parent=0 // pred_fallthru
    _
  // Predicated region
  $region6: #{tpu_custom_call.1} parent=0 // pred_check
    _
  $region7: #{tpu_custom_call.1} parent=0 // pred_check_branch
    %23 = sbr.rel (0) target = $region9
  $region8: #{tpu_custom_call.1} parent=0 // pred_region
    _
  $region9: #{tpu_custom_call.1} parent=0 // pred_fallthru
    _
  // Predicated region
  $region10: #{tpu_custom_call.1} parent=0 // pred_check
    _
  $region11: #{tpu_custom_call.1} parent=0 // pred_check_branch
    %25 = sbr.rel (0) target = $region13
  $region12: #{tpu_custom_call.1} parent=0 // pred_region
    _
  $region13: #{tpu_custom_call.1} parent=0 // pred_fallthru
    _
  // Predicated region
  $region14: #{tpu_custom_call.1} parent=0 // pred_check
    _
  $region15: #{tpu_custom_call.1} parent=0 // pred_check_branch
    %27 = sbr.rel (0) target = $region17
  $region16: #{tpu_custom_call.1} parent=0 // pred_region
    _
  $region17: #{tpu_custom_call.1} parent=0 // pred_fallthru
    _
  // Predicated region
  $region18: #{tpu_custom_call.1} parent=0 // pred_check
    _
  $region19: #{tpu_custom_call.1} parent=0 // pred_check_branch
    %29 = sbr.rel (0) target = $region21
  $region20: #{tpu_custom_call.1} parent=0 // pred_region
    _
  $region21: #{tpu_custom_call.1} parent=0 // pred_fallthru
    _
  // Predicated region
  $region22: #{tpu_custom_call.1} parent=0 // pred_check
    _
  $region23: #{tpu_custom_call.1} parent=0 // pred_check_branch
    %31 = sbr.rel (0) target = $region25
  $region24: #{tpu_custom_call.1} parent=0 // pred_region
    _
  $region25: #{tpu_custom_call.1} parent=0 // pred_fallthru
    _
  // Predicated region
  $region26: #{tpu_custom_call.1} parent=0 // pred_check
    _
  $region27: #{tpu_custom_call.1} parent=0 // pred_check_branch
    %33 = sbr.rel (0) target = $region29
  $region28: #{tpu_custom_call.1} parent=0 // pred_region
    _
  $region29: #{tpu_custom_call.1} parent=0 // pred_fallthru
    _
  // Predicated region
  $region30: #{tpu_custom_call.1} parent=0 // pred_check
    _
  $region31: #{tpu_custom_call.1} parent=0 // pred_check_branch
    %35 = sbr.rel (0) target = $region33
  $region32: #{tpu_custom_call.1} parent=0 // pred_region
    _
  $region33: #{tpu_custom_call.1} parent=0 // pred_fallthru
    _
  // Predicated region
  $region34: #{tpu_custom_call.1} parent=0 // pred_check
    _
  $region35: #{tpu_custom_call.1} parent=0 // pred_check_branch
    %37 = sbr.rel (0) target = $region37
  $region36: #{tpu_custom_call.1} parent=0 // pred_region
    _
  $region37: #{tpu_custom_call.1} parent=0 // pred_fallthru
    _
  // Predicated region
  $region38: #{tpu_custom_call.1} parent=0 // pred_check
    _
  $region39: #{tpu_custom_call.1} parent=0 // pred_check_branch
    %39 = sbr.rel (0) target = $region41
  $region40: #{tpu_custom_call.1} parent=0 // pred_region
    _
  $region41: #{tpu_custom_call.1} parent=0 // pred_fallthru
    _
  // Predicated region
  $region42: #{tpu_custom_call.1} parent=0 // pred_check
    _
  $region43: #{tpu_custom_call.1} parent=0 // pred_check_branch
    %41 = sbr.rel (0) target = $region45
  $region44: #{tpu_custom_call.1} parent=0 // pred_region
    _
  $region45: #{tpu_custom_call.1} parent=0 // pred_fallthru
    _
  // Predicated region
  $region46: #{tpu_custom_call.1} parent=0 // pred_check
    _
  $region47: #{tpu_custom_call.1} parent=0 // pred_check_branch
    %43 = sbr.rel (0) target = $region49
  $region48: #{tpu_custom_call.1} parent=0 // pred_region
    _
  $region49: #{tpu_custom_call.1} parent=0 // pred_fallthru
    _
  // Predicated region
  $region50: #{tpu_custom_call.1} parent=0 // pred_check
    _
  $region51: #{tpu_custom_call.1} parent=0 // pred_check_branch
    %45 = sbr.rel (0) target = $region53
  $region52: #{tpu_custom_call.1} parent=0 // pred_region
    _
  $region53: #{tpu_custom_call.1} parent=0 // pred_fallthru
    _
  %v46 = vld [vmem:[%s1] sm:$0x1]
  %v47 = vld [vmem:[%s2] sm:$0x1]
  %v48 = vld [vmem:[%s0] sm:$0xff]
  %v50 = vlaneseq
  %v51 = vshrl.u32 %v50, 7
  %v52 = vsub.s32 0, %v51
  %v53 = vrot.slane %v46, %v52
  %v55 = vmul.f32 %v48, %v53
  %v57 = vlaneseq
  %v58 = vshrl.u32 %v57, 7
  %v59 = vsub.s32 0, %v58
  %v60 = vrot.slane %v47, %v59
  %v62 = vadd.f32 %v55, %v60
  %v63 = vld [vmem:[%s3] sm:$0xff]
  %v64 = vld [vmem:[%s3 + $0x8] sm:$0xff]
  %v65 = vld [vmem:[%s3 + $0x10] sm:$0xff]
  %v66 = vld [vmem:[%s3 + $0x18] sm:$0xff]
  %v67 = vld [vmem:[%s4] sm:$0x1]
  %v68 = vld [vmem:[%s5] sm:$0x1]
  %v69 = vld [vmem:[%s6] sm:$0x1]
  %v71 = vlaneseq
  %v72 = vshrl.u32 %v71, 7
  %v73 = vsub.s32 0, %v72
  %v74 = vrot.slane %v67, %v73
  %vm76 = vcmask 261120
  %v78 = vsel %vm76, %v62, 0
  %80 = vmatprep.subr.mxu0 0.0
  %81 = vmatpush1.msra.mxu0 0.0
  %82 = vmatprep.subr.mxu0 0.0
  %83 = vmatpush1.msra.mxu0 0.0
  %84 = vmatprep.subr.mxu0 0.0
  %85 = vmatpush1.msra.mxu0 0.0
  %86 = vmatprep.subr.mxu0 0.0
  %87 = vmatpush1.msra.mxu0 0.0
  %88 = vmatprep.subr.mxu0 0.0
  %89 = vmatpush1.msra.mxu0 0.0
  %90 = vmatprep.subr.mxu0 0.0
  %91 = vmatpush1.msra.mxu0 0.0
  %92 = vmatprep.subr.mxu0 0.0
  %93 = vmatpush1.msra.mxu0 0.0
  %94 = vmatprep.subr.mxu0 0.0
  %95 = vmatpush1.msra.mxu0 0.0
  %96 = vmatprep.subr.mxu0 0.0
  %97 = vmatpush1.msra.mxu0 0.0
  %98 = vmatprep.subr.mxu0 0.0
  %99 = vmatpush1.msra.mxu0 0.0
  %100 = vmatprep.subr.mxu0 0.0
  %101 = vmatpush1.msra.mxu0 0.0
  %102 = vmatprep.subr.mxu0 0.0
  %103 = vmatpush1.msra.mxu0 0.0
  %104 = vmatprep.subr.mxu0 0.0
  %105 = vmatpush1.msra.mxu0 %v66
  %106 = vmatprep.subr.mxu0 0.0
  %107 = vmatpush1.msra.mxu0 %v65
  %108 = vmatprep.subr.mxu0 0.0
  %109 = vmatpush1.msra.mxu0 %v64
  %110 = vmatprep.subr.mxu0 0.0
  %111 = vmatpush1.msra.mxu0 %v63
  %112 = vmatprep.subr.mxu0 0.0
  %113 = vmatpush2.msra.mxu0 0.0
  %114 = vmatprep.subr.mxu0 0.0
  %115 = vmatpush2.msra.mxu0 0.0
  %116 = vmatprep.subr.mxu0 0.0
  %117 = vmatpush2.msra.mxu0 0.0
  %118 = vmatprep.subr.mxu0 0.0
  %119 = vmatpush2.msra.mxu0 0.0
  %120 = vmatprep.subr.mxu0 0.0
  %121 = vmatpush2.msra.mxu0 0.0
  %122 = vmatprep.subr.mxu0 0.0
  %123 = vmatpush2.msra.mxu0 0.0
  %124 = vmatprep.subr.mxu0 0.0
  %125 = vmatpush2.msra.mxu0 0.0
  %126 = vmatprep.subr.mxu0 0.0
  %127 = vmatpush2.msra.mxu0 0.0
  %128 = vmatprep.subr.mxu0 0.0
  %129 = vmatpush2.msra.mxu0 0.0
  %130 = vmatprep.subr.mxu0 0.0
  %131 = vmatpush2.msra.mxu0 0.0
  %132 = vmatprep.subr.mxu0 0.0
  %133 = vmatpush2.msra.mxu0 0.0
  %134 = vmatprep.subr.mxu0 0.0
  %135 = vmatpush2.msra.mxu0 0.0
  %136 = vmatprep.subr.mxu0 0.0
  %137 = vmatpush2.msra.mxu0 0.0
  %138 = vmatprep.subr.mxu0 0.0
  %139 = vmatpush2.msra.mxu0 0.0
  %140 = vmatprep.subr.mxu0 0.0
  %141 = vmatpush2.msra.mxu0 0.0
  %142 = vmatprep.subr.mxu0 0.0
  %143 = vmatpush2.msra.mxu0 0.0
  %144 = vmatprep.mubr.f32.mxu0 0.0
  %145 = vmatmul.mubr.f32.gmra.mxu0 %v78
  %v146 = vpop.f32.mrf.mxu0
  %v147 = vadd.f32 %v74, %v146
  %v148 = vpop.f32.mrf.mxu0
  %149 = vdwg.mxu0
  %v150 = vmax.f32 %v147, 0.0
  %vm151 = vcmp.ne.f32.partialorder %v147, %v147
  %v152 = vadd.f32 %v147, 0.0
  %v153 = vand.u32 2147483647, %v147
  %v154 = vsub.f32 0.0, %v153
  %v155 = vmul.f32 %v154, 1.442695
  %v156 = vpow.pop %v155
  %v157 = vadd.f32 %v156, 1.0
  %v158 = vlog2.pop %v157
  %v159 = vmul.f32 %v158, 0.6931472
  %v160 = vmul.f32 -0.5, %v156
  %v161 = vadd.f32 %v160, 1.0
  %v162 = vmul.f32 %v161, %v156
  %v163 = vand.u32 2147483647, %v156
  %vm164 = vcmp.lt.f32.partialorder %v163, 0.0004427343
  %v165 = vsel %vm164, %v162, %v159
  %v166 = vadd.f32 %v150, %v165
  %v167 = vsel %vm151, %v152, %v166
  %v168 = vtanh.pop %v167
  %v169 = vmul.f32 %v147, %v168
  %v171 = vlaneseq
  %v172 = vshrl.u32 %v171, 7
  %v173 = vsub.s32 0, %v172
  %v174 = vrot.slane %v68, %v173
  %v176 = vmul.f32 %v169, %v174
  %v178 = vlaneseq
  %v179 = vshrl.u32 %v178, 7
  %v180 = vsub.s32 0, %v179
  %v181 = vrot.slane %v69, %v180
  %v183 = vadd.f32 %v176, %v181
  %v184 = vld [vmem:[%s7] sm:$0xff]
  %v185 = vld [vmem:[%s7 + $0x8] sm:$0xff]
  %v186 = vld [vmem:[%s7 + $0x10] sm:$0xff]
  %v187 = vld [vmem:[%s7 + $0x18] sm:$0xff]
  %v188 = vld [vmem:[%s7 + $0x20] sm:$0xff]
  %v189 = vld [vmem:[%s7 + $0x28] sm:$0xff]
  %v190 = vld [vmem:[%s7 + $0x30] sm:$0xff]
  %v191 = vld [vmem:[%s7 + $0x38] sm:$0xff]
  %v192 = vld [vmem:[%s8] sm:$0x1]
  %v193 = vld [vmem:[%s9] sm:$0x1]
  %v194 = vld [vmem:[%s10] sm:$0x1]
  %v196 = vlaneseq
  %v197 = vshrl.u32 %v196, 7
  %v198 = vsub.s32 0, %v197
  %v199 = vrot.slane %v192, %v198
  %vm201 = vcmask 523264
  %v203 = vsel %vm201, %v183, 0
  %205 = vmatprep.subr.mxu0 0.0
  %206 = vmatpush1.msra.mxu0 0.0
  %207 = vmatprep.subr.mxu0 0.0
  %208 = vmatpush1.msra.mxu0 0.0
  %209 = vmatprep.subr.mxu0 0.0
  %210 = vmatpush1.msra.mxu0 0.0
  %211 = vmatprep.subr.mxu0 0.0
  %212 = vmatpush1.msra.mxu0 0.0
  %213 = vmatprep.subr.mxu0 0.0
  %214 = vmatpush1.msra.mxu0 0.0
  %215 = vmatprep.subr.mxu0 0.0
  %216 = vmatpush1.msra.mxu0 0.0
  %217 = vmatprep.subr.mxu0 0.0
  %218 = vmatpush1.msra.mxu0 0.0
  %219 = vmatprep.subr.mxu0 0.0
  %220 = vmatpush1.msra.mxu0 0.0
  %221 = vmatprep.subr.mxu0 0.0
  %222 = vmatpush1.msra.mxu0 %v191
  %223 = vmatprep.subr.mxu0 0.0
  %224 = vmatpush1.msra.mxu0 %v190
  %225 = vmatprep.subr.mxu0 0.0
  %226 = vmatpush1.msra.mxu0 %v189
  %227 = vmatprep.subr.mxu0 0.0
  %228 = vmatpush1.msra.mxu0 %v188
  %229 = vmatprep.subr.mxu0 0.0
  %230 = vmatpush1.msra.mxu0 %v187
  %231 = vmatprep.subr.mxu0 0.0
  %232 = vmatpush1.msra.mxu0 %v186
  %233 = vmatprep.subr.mxu0 0.0
  %234 = vmatpush1.msra.mxu0 %v185
  %235 = vmatprep.subr.mxu0 0.0
  %236 = vmatpush1.msra.mxu0 %v184
  %237 = vmatprep.subr.mxu0 0.0
  %238 = vmatpush2.msra.mxu0 0.0
  %239 = vmatprep.subr.mxu0 0.0
  %240 = vmatpush2.msra.mxu0 0.0
  %241 = vmatprep.subr.mxu0 0.0
  %242 = vmatpush2.msra.mxu0 0.0
  %243 = vmatprep.subr.mxu0 0.0
  %244 = vmatpush2.msra.mxu0 0.0
  %245 = vmatprep.subr.mxu0 0.0
  %246 = vmatpush2.msra.mxu0 0.0
  %247 = vmatprep.subr.mxu0 0.0
  %248 = vmatpush2.msra.mxu0 0.0
  %249 = vmatprep.subr.mxu0 0.0
  %250 = vmatpush2.msra.mxu0 0.0
  %251 = vmatprep.subr.mxu0 0.0
  %252 = vmatpush2.msra.mxu0 0.0
  %253 = vmatprep.subr.mxu0 0.0
  %254 = vmatpush2.msra.mxu0 0.0
  %255 = vmatprep.subr.mxu0 0.0
  %256 = vmatpush2.msra.mxu0 0.0
  %257 = vmatprep.subr.mxu0 0.0
  %258 = vmatpush2.msra.mxu0 0.0
  %259 = vmatprep.subr.mxu0 0.0
  %260 = vmatpush2.msra.mxu0 0.0
  %261 = vmatprep.subr.mxu0 0.0
  %262 = vmatpush2.msra.mxu0 0.0
  %263 = vmatprep.subr.mxu0 0.0
  %264 = vmatpush2.msra.mxu0 0.0
  %265 = vmatprep.subr.mxu0 0.0
  %266 = vmatpush2.msra.mxu0 0.0
  %267 = vmatprep.subr.mxu0 0.0
  %268 = vmatpush2.msra.mxu0 0.0
  %269 = vmatprep.mubr.f32.mxu0 0.0
  %270 = vmatmul.mubr.f32.gmra.mxu0 %v203
  %v271 = vpop.f32.mrf.mxu0
  %v272 = vadd.f32 %v199, %v271
  %v273 = vpop.f32.mrf.mxu0
  %274 = vdwg.mxu0
  %v275 = vmax.f32 %v272, 0.0
  %vm276 = vcmp.ne.f32.partialorder %v272, %v272
  %v277 = vadd.f32 %v272, 0.0
  %v278 = vand.u32 2147483647, %v272
  %v279 = vsub.f32 0.0, %v278
  %v280 = vmul.f32 %v279, 1.442695
  %v281 = vpow.pop %v280
  %v282 = vadd.f32 %v281, 1.0
  %v283 = vlog2.pop %v282
  %v284 = vmul.f32 %v283, 0.6931472
  %v285 = vmul.f32 -0.5, %v281
  %v286 = vadd.f32 %v285, 1.0
  %v287 = vmul.f32 %v286, %v281
  %v288 = vand.u32 2147483647, %v281
  %vm289 = vcmp.lt.f32.partialorder %v288, 0.0004427343
  %v290 = vsel %vm289, %v287, %v284
  %v291 = vadd.f32 %v275, %v290
  %v292 = vsel %vm276, %v277, %v291
  %v293 = vtanh.pop %v292
  %v294 = vmul.f32 %v272, %v293
  %v296 = vlaneseq
  %v297 = vshrl.u32 %v296, 7
  %v298 = vsub.s32 0, %v297
  %v299 = vrot.slane %v193, %v298
  %v301 = vmul.f32 %v294, %v299
  %v303 = vlaneseq
  %v304 = vshrl.u32 %v303, 7
  %v305 = vsub.s32 0, %v304
  %v306 = vrot.slane %v194, %v305
  %v308 = vadd.f32 %v301, %v306
  %v309 = vld [vmem:[%s11] sm:$0xff]
  %v310 = vld [vmem:[%s11 + $0x8] sm:$0xff]
  %v311 = vld [vmem:[%s11 + $0x10] sm:$0xff]
  %v312 = vld [vmem:[%s11 + $0x18] sm:$0xff]
  %v313 = vld [vmem:[#allocation2] sm:$0x1]
  %v315 = vlaneseq
  %v316 = vshrl.u32 %v315, 7
  %v317 = vsub.s32 0, %v316
  %v318 = vrot.slane %v313, %v317
  %v321 = vsel %vm76, %v308, 0
  %323 = vmatprep.subr.mxu0 0.0
  %324 = vmatpush1.msra.mxu0 0.0
  %325 = vmatprep.subr.mxu0 0.0
  %326 = vmatpush1.msra.mxu0 0.0
  %327 = vmatprep.subr.mxu0 0.0
  %328 = vmatpush1.msra.mxu0 0.0
  %329 = vmatprep.subr.mxu0 0.0
  %330 = vmatpush1.msra.mxu0 0.0
  %331 = vmatprep.subr.mxu0 0.0
  %332 = vmatpush1.msra.mxu0 0.0
  %333 = vmatprep.subr.mxu0 0.0
  %334 = vmatpush1.msra.mxu0 0.0
  %335 = vmatprep.subr.mxu0 0.0
  %336 = vmatpush1.msra.mxu0 0.0
  %337 = vmatprep.subr.mxu0 0.0
  %338 = vmatpush1.msra.mxu0 0.0
  %339 = vmatprep.subr.mxu0 0.0
  %340 = vmatpush1.msra.mxu0 0.0
  %341 = vmatprep.subr.mxu0 0.0
  %342 = vmatpush1.msra.mxu0 0.0
  %343 = vmatprep.subr.mxu0 0.0
  %344 = vmatpush1.msra.mxu0 0.0
  %345 = vmatprep.subr.mxu0 0.0
  %346 = vmatpush1.msra.mxu0 0.0
  %347 = vmatprep.subr.mxu0 0.0
  %348 = vmatpush1.msra.mxu0 %v312
  %349 = vmatprep.subr.mxu0 0.0
  %350 = vmatpush1.msra.mxu0 %v311
  %351 = vmatprep.subr.mxu0 0.0
  %352 = vmatpush1.msra.mxu0 %v310
  %353 = vmatprep.subr.mxu0 0.0
  %354 = vmatpush1.msra.mxu0 %v309
  %355 = vmatprep.subr.mxu0 0.0
  %356 = vmatpush2.msra.mxu0 0.0
  %357 = vmatprep.subr.mxu0 0.0
  %358 = vmatpush2.msra.mxu0 0.0
  %359 = vmatprep.subr.mxu0 0.0
  %360 = vmatpush2.msra.mxu0 0.0
  %361 = vmatprep.subr.mxu0 0.0
  %362 = vmatpush2.msra.mxu0 0.0
  %363 = vmatprep.subr.mxu0 0.0
  %364 = vmatpush2.msra.mxu0 0.0
  %365 = vmatprep.subr.mxu0 0.0
  %366 = vmatpush2.msra.mxu0 0.0
  %367 = vmatprep.subr.mxu0 0.0
  %368 = vmatpush2.msra.mxu0 0.0
  %369 = vmatprep.subr.mxu0 0.0
  %370 = vmatpush2.msra.mxu0 0.0
  %371 = vmatprep.subr.mxu0 0.0
  %372 = vmatpush2.msra.mxu0 0.0
  %373 = vmatprep.subr.mxu0 0.0
  %374 = vmatpush2.msra.mxu0 0.0
  %375 = vmatprep.subr.mxu0 0.0
  %376 = vmatpush2.msra.mxu0 0.0
  %377 = vmatprep.subr.mxu0 0.0
  %378 = vmatpush2.msra.mxu0 0.0
  %379 = vmatprep.subr.mxu0 0.0
  %380 = vmatpush2.msra.mxu0 0.0
  %381 = vmatprep.subr.mxu0 0.0
  %382 = vmatpush2.msra.mxu0 0.0
  %383 = vmatprep.subr.mxu0 0.0
  %384 = vmatpush2.msra.mxu0 0.0
  %385 = vmatprep.subr.mxu0 0.0
  %386 = vmatpush2.msra.mxu0 0.0
  %387 = vmatprep.mubr.f32.mxu0 0.0
  %388 = vmatmul.mubr.f32.gmra.mxu0 %v321
  %v389 = vpop.f32.mrf.mxu0
  %v390 = vadd.f32 %v318, %v389
  %v391 = vpop.f32.mrf.mxu0
  %392 = vdwg.mxu0
  %vm393 = vcmask 7168
  %394 = vst.msk [vmem:[%s13] sm:$0xff] %vm393, %v390
  // Predicated region
  $region54: #{tpu_custom_call.1} parent=0 // pred_check
    _
  $region55: #{tpu_custom_call.1} parent=0 // pred_check_branch
    %396 = sbr.rel (0) target = $region57
  $region56: #{tpu_custom_call.1} parent=0 // pred_region
    _
  $region57: #{tpu_custom_call.1} parent=0 // pred_fallthru
    _
  // Predicated region
  $region58: #{tpu_custom_call.1} parent=0 // pred_check
    _
  $region59: #{tpu_custom_call.1} parent=0 // pred_check_branch
    %398 = sbr.rel (0) target = $region61
  $region60: #{tpu_custom_call.1} parent=0 // pred_region
    _
  $region61: #{tpu_custom_call.1} parent=0 // pred_fallthru
    _

</llo_original>
